<compile_context>
chip_gen: v6e
topology: v6e:2x2x1
jax: 0.10.0
libtpu: 0.0.40
codegen_flags: <defaults>
</compile_context>

<pallas_src>
import math

import jax
import jax.numpy as jnp
from jax import lax
from jax.experimental import pallas as pl
from jax.experimental.pallas import tpu as pltpu

# ---- module config (defaults of SpectrogramFeatures.__init__) --------------
SAMPLE_RATE = 8000
WINDOW_SIZE = 0.02
WINDOW_STRIDE = 0.01
WIN_LENGTH = int(SAMPLE_RATE * WINDOW_SIZE)        # 160
HOP_LENGTH = int(SAMPLE_RATE * WINDOW_STRIDE)      # 80
N_FFT = 2 ** math.ceil(math.log2(WIN_LENGTH))      # 256
N_FREQ = N_FFT // 2 + 1                            # 129 (onesided)
F_OUT = ((N_FREQ + 7) // 8) * 8                    # 136 sublane-dense kernel rows
DITHER = 1e-5
PAD_TO = 8
# log=True, normalize='per_feature', frame_splicing=1, no preemph attribute


# ---- deterministic "parameters": hamming window folded into one DFT matrix -
def _hamming_window(n):
    k = jnp.arange(n, dtype=jnp.float32)
    return 0.54 - 0.46 * jnp.cos(2.0 * jnp.pi * k / (n - 1))   # periodic=False


def _packed_dft_matrix():
    win = _hamming_window(WIN_LENGTH)
    left = (N_FFT - WIN_LENGTH) // 2                 # torch.stft centers the window
    win_p = jnp.zeros((N_FFT,), jnp.float32).at[left:left + WIN_LENGTH].set(win)
    k = jnp.arange(N_FFT, dtype=jnp.float32)
    f = jnp.arange(N_FREQ, dtype=jnp.float32)
    ang = 2.0 * jnp.pi * f[:, None] * k[None, :] / N_FFT
    wcos = jnp.cos(ang) * win_p[None, :]             # (129, 256) real rows
    wsin = -jnp.sin(ang) * win_p[None, :]            # (129, 256) imag rows
    # sin rows of bin 0 (DC) and bin 128 (Nyquist) are identically zero, so the
    # packed weight is exactly (256, 256): rows 0..128 = cos, row 128+f = sin(f).
    return jnp.concatenate([wcos, wsin[1:N_FREQ - 1]], axis=0)


# ---- Pallas kernel: per-batch STFT power + log + normalize + mask ----------
def _spec_kernel(seq_ref, frames_ref, w_ref, out_ref):
    b = pl.program_id(0)
    frames = frames_ref[0]                           # (N_FFT, T)  bf16

    # One full-tile MXU matmul. Row layout of y:
    #   rows 0..128   : real part of bins 0..128
    #   rows 129..255 : imag part of bins 1..127  (row 128+f holds imag of bin f)
    y = jnp.dot(w_ref[...], frames, preferred_element_type=jnp.float32)  # (256, T)
    y2 = y * y

    half = N_FFT // 2                                # 128
    top = y2[:half]                                  # real^2, bins 0..127
    bot = y2[half:]                                  # [real128^2, imag1^2..imag127^2]
    fidx = lax.broadcasted_iota(jnp.int32, (half, 1), 0)
    power_low = top + jnp.where(fidx >= 1, bot, 0.0)            # bins 0..127
    power = jnp.concatenate([power_low, bot[:F_OUT - half]], axis=0)   # (136, T)
    # row 128 = |X_128|^2 (imag(Nyquist)=0); rows 129..135 are pad, sliced off.

    # log(sqrt(p) + 1e-20) == 0.5*log(p) up to the tiny clamp; fuse sqrt into log
    feat = 0.5 * jnp.log(power + 1e-30)

    # per_feature normalization over the first seq_len[b] frames (unbiased std)
    n = seq_ref[b]                                   # SMEM scalar (valid frames)
    nf = n.astype(jnp.float32)
    T = feat.shape[1]
    t_idx = lax.broadcasted_iota(jnp.int32, (1, T), 1)
    valid = t_idx < n                                # (1, T) mask, broadcast below
    inv_n = 1.0 / jnp.maximum(nf, 1.0)
    mean = jnp.sum(jnp.where(valid, feat, 0.0), axis=1, keepdims=True) * inv_n
    centered = feat - mean
    inv_nm1 = 1.0 / jnp.maximum(nf - 1.0, 1.0)       # guard seq_len <= 1
    var = jnp.sum(jnp.where(valid, centered * centered, 0.0),
                  axis=1, keepdims=True) * inv_nm1
    inv_std = pl.reciprocal(jnp.sqrt(var) + 1e-5, approx=True)   # x_std += 1e-05

    # masked_fill(mask, 0) for frames >= seq_len (also zeros the lane padding)
    out_ref[0] = jnp.where(valid, centered * inv_std, 0.0).astype(out_ref.dtype)


# ---- wrapper: glue (dither, reflect pad, framing) + pallas_call ------------
def spectrogram_features(x, seq_len, key):
    """x: (B, L) audio, seq_len: (B,) sample lengths. Returns (B, N_FREQ, T_pad8)."""
    B, L = x.shape
    dtype = x.dtype

    # get_seq_len: number of valid frames
    seq_frames = jnp.ceil(seq_len.astype(jnp.float32) / HOP_LENGTH).astype(jnp.int32)

    # dither in fp32 (1e-5 is below bf16 resolution; add before the bf16 cast)
    if DITHER > 0:
        x = x + DITHER * jax.random.normal(key, x.shape, dtype=jnp.float32)

    # torch.stft(center=True): reflect-pad by n_fft//2, frame with hop
    pad = N_FFT // 2
    x_pad = jnp.pad(x.astype(jnp.float32), ((0, 0), (pad, pad)), mode="reflect")

    n_frames = 1 + L // HOP_LENGTH
    rem = n_frames % PAD_TO
    t_pad8 = n_frames if rem == 0 else n_frames + (PAD_TO - rem)   # module output T
    t_pad128 = ((t_pad8 + 127) // 128) * 128                       # lane-dense kernel T

    # frame gather materialized in bf16 (halves its HBM traffic).
    # TODO(synk): build frames inside the kernel from raw audio (hop-block
    # decomposition of the packed weight) to drop the remaining 3.2x expansion.
    x_bf = x_pad.astype(jnp.bfloat16)
    idx = jnp.arange(n_frames)[:, None] * HOP_LENGTH + jnp.arange(N_FFT)[None, :]
    frames = jnp.transpose(x_bf[:, idx], (0, 2, 1))        # (B, N_FFT, n_frames)
    frames = jnp.pad(frames, ((0, 0), (0, 0), (0, t_pad128 - n_frames)))

    w = _packed_dft_matrix().astype(jnp.bfloat16)           # (256, 256), ~128 KiB

    out = pl.pallas_call(
        _spec_kernel,
        out_shape=jax.ShapeDtypeStruct((B, F_OUT, t_pad128), jnp.float32),
        grid_spec=pltpu.PrefetchScalarGridSpec(
            num_scalar_prefetch=1,                 # seq_frames -> SMEM
            grid=(B,),
            in_specs=[
                pl.BlockSpec((1, N_FFT, t_pad128), lambda b, sl: (b, 0, 0)),
                pl.BlockSpec((N_FFT, N_FFT), lambda b, sl: (0, 0)),  # resident weight
            ],
            out_specs=pl.BlockSpec((1, F_OUT, t_pad128), lambda b, sl: (b, 0, 0)),
        ),
        compiler_params=pltpu.CompilerParams(
            dimension_semantics=("parallel",),      # batch across TCs (v7x megacore)
            vmem_limit_bytes=48 * 1024 * 1024,      # full-T block also fits v5e
        ),
    )(seq_frames, frames, w)

    # slice the dense kernel tile back to the module's (B, 129, T_pad8) layout
    return out[:, :N_FREQ, :t_pad8].astype(dtype)


if __name__ == "__main__":
    key = jax.random.PRNGKey(0)
    k_x, k_dither = jax.random.split(key)

    B, L = 2, 400                      # small audio: 2 clips of 400 samples
    x = jax.random.normal(k_x, (B, L), dtype=jnp.float32)
    seq_len = jnp.array([400, 320], dtype=jnp.int32)   # valid samples per clip

    out = spectrogram_features(x, seq_len, k_dither)
    jax.block_until_ready(out)
    assert out.shape == (B, N_FREQ, 8), out.shape
    assert bool(jnp.all(jnp.isfinite(out))), "non-finite output"
    print("KERNEL_OK")
</pallas_src>

<mosaic_0001>
module attributes {stable_mosaic.version = 11 : i64} {
  func.func @_spec_kernel(%arg0: i32, %arg1: memref<2xi32, #tpu.memory_space<smem>>, %arg2: memref<1x256x128xbf16, #tpu.memory_space<vmem>>, %arg3: memref<256x256xbf16, #tpu.memory_space<vmem>>, %arg4: memref<1x136x128xf32, #tpu.memory_space<vmem>>) attributes {dimension_semantics = [#tpu.dimension_semantics<parallel>], iteration_bounds = array<i64: 2>, scalar_prefetch = 1 : i64, scratch_operands = 0 : i64, tpu.core_type = #tpu.core_type<tc>, window_params = [{transform_indices = @transform_0, window_bounds = array<i64: 1, 256, 128>}, {pipeline_mode = #tpu.pipeline_mode<synchronous>, transform_indices = @transform_1, window_bounds = array<i64: 256, 256>}, {transform_indices = @transform_2, window_bounds = array<i64: 1, 136, 128>}]} {
    %c0 = arith.constant 0 : index
    %c0_0 = arith.constant 0 : index
    %c0_1 = arith.constant 0 : index
    %0 = vector.load %arg2[%c0, %c0_0, %c0_1] : memref<1x256x128xbf16, #tpu.memory_space<vmem>>, vector<1x256x128xbf16>
    %1 = vector.shape_cast %0 : vector<1x256x128xbf16> to vector<256x128xbf16>
    %c0_2 = arith.constant 0 : index
    %c0_3 = arith.constant 0 : index
    %2 = vector.load %arg3[%c0_2, %c0_3] : memref<256x256xbf16, #tpu.memory_space<vmem>>, vector<256x256xbf16>
    %cst = arith.constant dense<0.000000e+00> : vector<256x128xf32>
    %3 = tpu.matmul %2, %1, %cst {dimension_numbers = #tpu.dot_dimension_numbers<[1], [0], [0], [1], [0, 0, 1, 1], [], []>} : vector<256x256xbf16>, vector<256x128xbf16>, vector<256x128xf32> -> vector<256x128xf32>
    %4 = arith.mulf %3, %3 : vector<256x128xf32>
    %5 = vector.extract_strided_slice %4 {offsets = [0, 0], sizes = [128, 128], strides = [1, 1]} : vector<256x128xf32> to vector<128x128xf32>
    %6 = vector.extract_strided_slice %4 {offsets = [128, 0], sizes = [128, 128], strides = [1, 1]} : vector<256x128xf32> to vector<128x128xf32>
    %7 = tpu.iota {dimensions = array<i32: 0>} : vector<128x1xi32>
    %c1_i32 = arith.constant 1 : i32
    %8 = vector.broadcast %c1_i32 : i32 to vector<128x1xi32>
    %9 = arith.cmpi sge, %7, %8 : vector<128x1xi32>
    %cst_4 = arith.constant 0.000000e+00 : f32
    %10 = vector.shape_cast %9 : vector<128x1xi1> to vector<128x1xi1>
    %11 = vector.broadcast %10 : vector<128x1xi1> to vector<128x128xi1>
    %12 = vector.broadcast %cst_4 : f32 to vector<128x128xf32>
    %13 = arith.select %11, %6, %12 : vector<128x128xi1>, vector<128x128xf32>
    %14 = arith.addf %5, %13 : vector<128x128xf32>
    %15 = vector.extract_strided_slice %6 {offsets = [0, 0], sizes = [8, 128], strides = [1, 1]} : vector<128x128xf32> to vector<8x128xf32>
    %16 = tpu.concatenate %14, %15 in 0 : vector<128x128xf32>, vector<8x128xf32> -> vector<136x128xf32>
    %cst_5 = arith.constant 1.000000e-30 : f32
    %17 = vector.broadcast %cst_5 : f32 to vector<136x128xf32>
    %18 = arith.addf %16, %17 : vector<136x128xf32>
    %19 = math.log %18 : vector<136x128xf32>
    %cst_6 = arith.constant 5.000000e-01 : f32
    %20 = vector.broadcast %cst_6 : f32 to vector<136x128xf32>
    %21 = arith.mulf %20, %19 : vector<136x128xf32>
    %22 = arith.index_cast %arg0 : i32 to index
    %23 = memref.load %arg1[%22] : memref<2xi32, #tpu.memory_space<smem>>
    %24 = arith.sitofp %23 : i32 to f32
    %25 = tpu.iota {dimensions = array<i32: 1>} : vector<1x128xi32>
    %26 = vector.broadcast %23 : i32 to vector<1x128xi32>
    %27 = arith.cmpi slt, %25, %26 : vector<1x128xi32>
    %cst_7 = arith.constant 1.000000e+00 : f32
    %28 = arith.maximumf %24, %cst_7 : f32
    %cst_8 = arith.constant 1.000000e+00 : f32
    %29 = arith.divf %cst_8, %28 : f32
    %cst_9 = arith.constant 0.000000e+00 : f32
    %30 = vector.shape_cast %27 : vector<1x128xi1> to vector<1x128xi1>
    %31 = vector.broadcast %30 : vector<1x128xi1> to vector<136x128xi1>
    %32 = vector.broadcast %cst_9 : f32 to vector<136x128xf32>
    %33 = arith.select %31, %21, %32 : vector<136x128xi1>, vector<136x128xf32>
    %cst_10 = arith.constant dense<0.000000e+00> : vector<136xf32>
    %34 = vector.multi_reduction <add>, %33, %cst_10 [1] : vector<136x128xf32> to vector<136xf32>
    %35 = vector.shape_cast %34 : vector<136xf32> to vector<136x1xf32>
    %36 = vector.broadcast %29 : f32 to vector<136x1xf32>
    %37 = arith.mulf %35, %36 : vector<136x1xf32>
    %38 = vector.broadcast %37 : vector<136x1xf32> to vector<136x128xf32>
    %39 = arith.subf %21, %38 : vector<136x128xf32>
    %cst_11 = arith.constant 1.000000e+00 : f32
    %40 = arith.subf %24, %cst_11 : f32
    %cst_12 = arith.constant 1.000000e+00 : f32
    %41 = arith.maximumf %40, %cst_12 : f32
    %cst_13 = arith.constant 1.000000e+00 : f32
    %42 = arith.divf %cst_13, %41 : f32
    %43 = arith.mulf %39, %39 : vector<136x128xf32>
    %cst_14 = arith.constant 0.000000e+00 : f32
    %44 = vector.shape_cast %27 : vector<1x128xi1> to vector<1x128xi1>
    %45 = vector.broadcast %44 : vector<1x128xi1> to vector<136x128xi1>
    %46 = vector.broadcast %cst_14 : f32 to vector<136x128xf32>
    %47 = arith.select %45, %43, %46 : vector<136x128xi1>, vector<136x128xf32>
    %cst_15 = arith.constant dense<0.000000e+00> : vector<136xf32>
    %48 = vector.multi_reduction <add>, %47, %cst_15 [1] : vector<136x128xf32> to vector<136xf32>
    %49 = vector.shape_cast %48 : vector<136xf32> to vector<136x1xf32>
    %50 = vector.broadcast %42 : f32 to vector<136x1xf32>
    %51 = arith.mulf %49, %50 : vector<136x1xf32>
    %52 = math.sqrt %51 : vector<136x1xf32>
    %cst_16 = arith.constant 9.99999974E-6 : f32
    %53 = vector.broadcast %cst_16 : f32 to vector<136x1xf32>
    %54 = arith.addf %52, %53 : vector<136x1xf32>
    %55 = tpu.reciprocal %54 {approx = true} : vector<136x1xf32> -> vector<136x1xf32>
    %56 = vector.broadcast %55 : vector<136x1xf32> to vector<136x128xf32>
    %57 = arith.mulf %39, %56 : vector<136x128xf32>
    %cst_17 = arith.constant 0.000000e+00 : f32
    %58 = vector.shape_cast %27 : vector<1x128xi1> to vector<1x128xi1>
    %59 = vector.broadcast %58 : vector<1x128xi1> to vector<136x128xi1>
    %60 = vector.broadcast %cst_17 : f32 to vector<136x128xf32>
    %61 = arith.select %59, %57, %60 : vector<136x128xi1>, vector<136x128xf32>
    %c0_18 = arith.constant 0 : index
    %c0_19 = arith.constant 0 : index
    %c0_20 = arith.constant 0 : index
    %62 = vector.load %arg4[%c0_18, %c0_19, %c0_20] : memref<1x136x128xf32, #tpu.memory_space<vmem>>, vector<1x136x128xf32>
    %63 = vector.shape_cast %62 : vector<1x136x128xf32> to vector<136x128xf32>
    %64 = vector.shape_cast %61 : vector<136x128xf32> to vector<1x136x128xf32>
    tpu.vector_store %arg4[%c0_18, %c0_19, %c0_20], %64 {strides = array<i32>} : memref<1x136x128xf32, #tpu.memory_space<vmem>>, vector<1x136x128xf32>,
    return
  }
  func.func @transform_0(%arg0: i32, %arg1: memref<2xi32, #tpu.memory_space<smem>>) -> (i32, i32, i32) {
    %c0_i32 = arith.constant 0 : i32
    %c0_i32_0 = arith.constant 0 : i32
    %c0_i32_1 = arith.constant 0 : i32
    return %arg0, %c0_i32, %c0_i32_0 : i32, i32, i32
  }
  func.func @transform_1(%arg0: i32, %arg1: memref<2xi32, #tpu.memory_space<smem>>) -> (i32, i32) {
    %c0_i32 = arith.constant 0 : i32
    %c0_i32_0 = arith.constant 0 : i32
    %c0_i32_1 = arith.constant 0 : i32
    return %c0_i32, %c0_i32_0 : i32, i32
  }
  func.func @transform_2(%arg0: i32, %arg1: memref<2xi32, #tpu.memory_space<smem>>) -> (i32, i32, i32) {
    %c0_i32 = arith.constant 0 : i32
    %c0_i32_0 = arith.constant 0 : i32
    %c0_i32_1 = arith.constant 0 : i32
    return %arg0, %c0_i32, %c0_i32_0 : i32, i32, i32
  }
}

</mosaic_0001>

<llo_original>
// kernel: tpu_custom_call.1
$region0: #{tpu_custom_call.1}
  #allocation0 [shape = 'u32[]', space=smem, size = 0x4, offset = 0x4, fixed_abs, tag = 'smem constant byte address 0x4 - core index']
  #allocation1 [shape = 'u32[144,128]{1,0:T(1,128)}', space=vmem, size = 0x12000, scoped, tag = 'internal scratch']
  #allocation2 [shape = 's32[1]{0}', space=sflag, size = 0x4, scoped, tag = 'scoped memory for tpu_custom_call.1']
  #allocation3 [shape = 'u8[512]{0}', space=smem, size = 0x200, scoped, tag = 'prefetched SMEM operand 0']
  %s0 = inlined_call_operand.hbm [shape: s32[2], index: 0, kind: input, shape index: {}]
  %s1 = inlined_call_operand.hbm [shape: bf16[2,256,128], index: 1, kind: input, shape index: {}]
  %s2 = inlined_call_operand.hbm [shape: bf16[256,256], index: 2, kind: input, shape index: {}]
  %s3 = inlined_call_operand.hbm [shape: f32[2,136,128], index: 3, kind: output, shape index: {}]
  %s4 = sld [smem:[#allocation0]]
  $region49: #{tpu_custom_call.1} parent=0
    _
  %s6 = ssub.s32 1, %s4
  %s7 = scalar_select 0, %s6, %s4
  %9 = dma.hbm_to_smem %s0, 16, [#allocation3], [#allocation2]
  %10 = dma.done [#allocation2], 16
  %11 = sfence
  $region1: #{tpu_custom_call.1} parent=0
    #allocation4 [shape = 'u8[131072]{0}', space=vmem, size = 0x20000, scoped, tag = 'input window, operand 1']
    #allocation5 [shape = 's32[2]{0}', space=sflag, size = 0x8, scoped, tag = 'scoped memory for tpu_custom_call.1']
    #allocation6 [shape = 's32[2]{0}', space=sflag, size = 0x8, scoped, tag = 'scoped memory for tpu_custom_call.1']
    #allocation7 [shape = 'u8[131072]{0}', space=vmem, size = 0x20000, scoped, tag = 'input window, operand 2, single buffered']
    #allocation8 [shape = 's32[1]{0}', space=sflag, size = 0x4, scoped, tag = 'scoped memory for tpu_custom_call.1']
    #allocation9 [shape = 'u8[139264]{0}', space=vmem, size = 0x22000, scoped, tag = 'output window, operand 0']
    %12 = vsyncpa [#allocation5], 0
    %s13 = scalar_lea.sflag [#allocation5], 1
    %14 = vsyncpa %s13, 0
    %15 = vsyncpa [#allocation8], 0
    %16 = vsyncpa [#allocation6], 0
    %s17 = scalar_lea.sflag [#allocation6], 1
    %18 = vsyncpa %s17, 0
    loop: start=0, step=1, limit=4
    $region2: #{tpu_custom_call.1} parent=1 // loop_pre_header
      _
    $region3: #{tpu_custom_call.1} parent=1 // loop_header
      %s20 = sphi 0, %s24
      %p21 = scmp.ge.s32.totalorder %s20, 4
      %s30 = sphi 0, %s32
      %s33 = sphi 0, %s30
      %s34 = sphi 0, %s33
      %s50 = sphi 0, %s34
      %s54 = sphi 0, %s54
      %s56 = sphi 0, %s54
      %s57 = sphi 0, %s56
      %s71 = sphi 0, %s57
      %s77 = sphi 0, %s79
      %s80 = sphi 0, %s77
      %s81 = sphi 0, %s80
      %s97 = sphi 0, %s81
    $region4: #{tpu_custom_call.1} parent=1 // loop_header_branch
      %23 = sbr.rel (%p21) target = $region8
    $region5: #{tpu_custom_call.1} parent=1 // loop_body
      %s25 = ssub.s32 %s20, 1
      %s26 = ssub.s32 %s20, 2
      %s27 = sadd.s32 %s20, 1
      %s28 = ssub.s32 %s20, %s27
      %p29 = scmp.eq.s32.totalorder %s28, 0
      %s31 = sadd.s32 %s30, 1
      %s32 = scalar_select %p29, %s30, %s31
      %p35 = pneg %p29
      %p36 = scmp.eq.s32.totalorder %s20, 1
      %p37 = por %p35, %p36
      %p38 = scmp.ne.s32.totalorder %s30, %s33
      %p39 = scmp.eq.s32.totalorder %s20, 0
      %p40 = por %p38, %p39
      %p41 = scmp.ne.s32.totalorder %s30, %s33
      %p42 = scmp.eq.s32.totalorder %s25, 1
      %p43 = por %p41, %p42
      %p44 = scmp.ne.s32.totalorder %s33, %s34
      %p45 = scmp.eq.s32.totalorder %s25, 0
      %p46 = por %p44, %p45
      %p47 = scmp.ne.s32.totalorder %s33, %s34
      %p48 = scmp.eq.s32.totalorder %s26, 1
      %p49 = por %p47, %p48
      %p51 = scmp.ne.s32.totalorder %s34, %s50
      %p52 = scmp.eq.s32.totalorder %s26, 0
      %p53 = por %p51, %p52
      %s55 = sadd.s32 %s54, 1
      %p58 = scmp.eq.s32.totalorder %s20, 1
      %p59 = scmp.ne.s32.totalorder %s54, %s56
      %p60 = scmp.eq.s32.totalorder %s20, 0
      %p61 = por %p59, %p60
      %p62 = scmp.ne.s32.totalorder %s54, %s56
      %p63 = scmp.eq.s32.totalorder %s25, 1
      %p64 = por %p62, %p63
      %p65 = scmp.ne.s32.totalorder %s56, %s57
      %p66 = scmp.eq.s32.totalorder %s25, 0
      %p67 = por %p65, %p66
      %p68 = scmp.ne.s32.totalorder %s56, %s57
      %p69 = scmp.eq.s32.totalorder %s26, 1
      %p70 = por %p68, %p69
      %p72 = scmp.ne.s32.totalorder %s57, %s71
      %p73 = scmp.eq.s32.totalorder %s26, 0
      %p74 = por %p72, %p73
      %s75 = ssub.s32 %s20, %s27
      %p76 = scmp.eq.s32.totalorder %s75, 0
      %s78 = sadd.s32 %s77, 1
      %s79 = scalar_select %p76, %s77, %s78
      %p82 = pneg %p76
      %p83 = scmp.eq.s32.totalorder %s20, 1
      %p84 = por %p82, %p83
      %p85 = scmp.ne.s32.totalorder %s77, %s80
      %p86 = scmp.eq.s32.totalorder %s20, 0
      %p87 = por %p85, %p86
      %p88 = scmp.ne.s32.totalorder %s77, %s80
      %p89 = scmp.eq.s32.totalorder %s25, 1
      %p90 = por %p88, %p89
      %p91 = scmp.ne.s32.totalorder %s80, %s81
      %p92 = scmp.eq.s32.totalorder %s25, 0
      %p93 = por %p91, %p92
      %p94 = scmp.ne.s32.totalorder %s80, %s81
      %p95 = scmp.eq.s32.totalorder %s26, 1
      %p96 = por %p94, %p95
      %p98 = scmp.ne.s32.totalorder %s81, %s97
      %p99 = scmp.eq.s32.totalorder %s26, 0
      %p100 = por %p98, %p99
      %p101 = scmp.le.s32.totalorder 1, %s20
      %p102 = scmp.lt.s32.totalorder %s20, 3
      %p103 = pnand %p101, %p102
      %p104 = pneg %p103
      // Predicated region
      $region9: #{tpu_custom_call.1} parent=5 // pred_check
        _
      $region10: #{tpu_custom_call.1} parent=5 // pred_check_branch
        %106 = sbr.rel (%p103) target = $region12
      $region11: #{tpu_custom_call.1} parent=5 // pred_region
        %s107 = ssub.s32 %s20, 1
        // Predicated region
        $region13: #{tpu_custom_call.1} parent=11 // pred_check
          %p108 = pneg %p67
        $region14: #{tpu_custom_call.1} parent=11 // pred_check_branch
          %110 = sbr.rel (%p108) target = $region16
        $region15: #{tpu_custom_call.1} parent=11 // pred_region
          %s112 = ssub.s32 4096, 4096
          %113 = vsyncadd [#allocation8], %s112
          %s114 = sshll.u32 [#allocation7], 4
          %s115 = int_to_ptr.vmem [resolvable:$true] %s114
          %120 = dma.hbm_to_vmem [thread:$0]  %s2, 4096, %s115, [#allocation8], 128, 128, 8
        $region16: #{tpu_custom_call.1} parent=11 // pred_fallthru
          _
      $region12: #{tpu_custom_call.1} parent=5 // pred_fallthru
        _
      %p121 = scmp.lt.s32.totalorder %s20, 2
      // Predicated region
      $region17: #{tpu_custom_call.1} parent=5 // pred_check
        %p122 = pneg %p121
      $region18: #{tpu_custom_call.1} parent=5 // pred_check_branch
        %124 = sbr.rel (%p122) target = $region20
      $region19: #{tpu_custom_call.1} parent=5 // pred_region
        // Predicated region
        $region21: #{tpu_custom_call.1} parent=19 // pred_check
          %p125 = pneg %p40
        $region22: #{tpu_custom_call.1} parent=19 // pred_check_branch
          %127 = sbr.rel (%p125) target = $region24
        $region23: #{tpu_custom_call.1} parent=19 // pred_region
          %s128 = sand.u32 %s30, 1
          %s129 = scalar_lea.sflag [#allocation5], %s128
          %s130 = sand.u32 %s30, 1
          %s131 = smul.addr %s130, 128
          %s132 = scalar_lea.vmem [#allocation4], %s131
          %s134 = ssub.s32 2048, 2048
          %135 = vsyncadd %s129, %s134
          %s136 = smul.addr %s20, 32
          %s137 = smul.addr %s136, 64
          %s138 = scalar_lea.hbm %s1, %s137
          %s139 = sshll.u32 %s132, 4
          %s140 = int_to_ptr.vmem [resolvable:$true] %s139
          %145 = dma.hbm_to_vmem [thread:$0]  %s138, 2048, %s140, %s129, 64, 64, 4
        $region24: #{tpu_custom_call.1} parent=19 // pred_fallthru
          _
      $region20: #{tpu_custom_call.1} parent=5 // pred_fallthru
        _
      %p146 = scmp.le.s32.totalorder 1, %s20
      %p147 = scmp.lt.s32.totalorder %s20, 3
      %p148 = pnand %p146, %p147
      %p149 = pneg %p148
      // Predicated region
      $region25: #{tpu_custom_call.1} parent=5 // pred_check
        _
      $region26: #{tpu_custom_call.1} parent=5 // pred_check_branch
        %151 = sbr.rel (%p148) target = $region28
      $region27: #{tpu_custom_call.1} parent=5 // pred_region
        %s152 = ssub.s32 %s20, 1
        %s153 = sand.u32 %s33, 1
        %s154 = scalar_lea.sflag [#allocation5], %s153
        %s155 = sand.u32 %s33, 1
        %s156 = smul.addr %s155, 128
        %s157 = scalar_lea.vmem [#allocation4], %s156
        // Predicated region
        $region29: #{tpu_custom_call.1} parent=27 // pred_check
          %p158 = pneg %p46
        $region30: #{tpu_custom_call.1} parent=27 // pred_check_branch
          %160 = sbr.rel (%p158) target = $region32
        $region31: #{tpu_custom_call.1} parent=27 // pred_region
          %161 = dma.done %s154, 2048
        $region32: #{tpu_custom_call.1} parent=27 // pred_fallthru
          _
        // Predicated region
        $region33: #{tpu_custom_call.1} parent=27 // pred_check
          %p162 = pneg %p67
        $region34: #{tpu_custom_call.1} parent=27 // pred_check_branch
          %164 = sbr.rel (%p162) target = $region36
        $region35: #{tpu_custom_call.1} parent=27 // pred_region
          %165 = dma.done [#allocation8], 4096
        $region36: #{tpu_custom_call.1} parent=27 // pred_fallthru
          _
        %s166 = sand.u32 %s33, 1
        %s167 = scalar_lea.sflag [#allocation5], %s166
        %s168 = sand.u32 %s33, 1
        %s169 = smul.addr %s168, 128
        %s170 = scalar_lea.vmem [#allocation4], %s169
        %p171 = pneg %p46
        %p172 = pneg %p43
        %p173 = pneg %p67
        %p174 = pneg %p64
        %p175 = pneg %p93
        %p176 = pneg %p90
        %s177 = sand.u32 %s80, 1
        %s178 = scalar_lea.sflag [#allocation6], %s177
        %s179 = sand.u32 %s80, 1
        %s180 = smul.addr %s179, 136
        %s181 = scalar_lea.vmem [#allocation9], %s180
        %v183 = vld [vmem:[%s157] sm:$0xf]
        %v184 = vld [vmem:[%s157 + $0x4] sm:$0xf]
        %v185 = vld [vmem:[%s157 + $0x8] sm:$0xf]
        %v186 = vld [vmem:[%s157 + $0xc] sm:$0xf]
        %v187 = vld [vmem:[%s157 + $0x10] sm:$0xf]
        %v188 = vld [vmem:[%s157 + $0x14] sm:$0xf]
        %v189 = vld [vmem:[%s157 + $0x18] sm:$0xf]
        %v190 = vld [vmem:[%s157 + $0x1c] sm:$0xf]
        %v191 = vld [vmem:[%s157 + $0x20] sm:$0xf]
        %v192 = vld [vmem:[%s157 + $0x24] sm:$0xf]
        %v193 = vld [vmem:[%s157 + $0x28] sm:$0xf]
        %v194 = vld [vmem:[%s157 + $0x2c] sm:$0xf]
        %v195 = vld [vmem:[%s157 + $0x30] sm:$0xf]
        %v196 = vld [vmem:[%s157 + $0x34] sm:$0xf]
        %v197 = vld [vmem:[%s157 + $0x38] sm:$0xf]
        %v198 = vld [vmem:[%s157 + $0x3c] sm:$0xf]
        %v199 = vld [vmem:[%s157 + $0x40] sm:$0xf]
        %v200 = vld [vmem:[%s157 + $0x44] sm:$0xf]
        %v201 = vld [vmem:[%s157 + $0x48] sm:$0xf]
        %v202 = vld [vmem:[%s157 + $0x4c] sm:$0xf]
        %v203 = vld [vmem:[%s157 + $0x50] sm:$0xf]
        %v204 = vld [vmem:[%s157 + $0x54] sm:$0xf]
        %v205 = vld [vmem:[%s157 + $0x58] sm:$0xf]
        %v206 = vld [vmem:[%s157 + $0x5c] sm:$0xf]
        %v207 = vld [vmem:[%s157 + $0x60] sm:$0xf]
        %v208 = vld [vmem:[%s157 + $0x64] sm:$0xf]
        %v209 = vld [vmem:[%s157 + $0x68] sm:$0xf]
        %v210 = vld [vmem:[%s157 + $0x6c] sm:$0xf]
        %v211 = vld [vmem:[%s157 + $0x70] sm:$0xf]
        %v212 = vld [vmem:[%s157 + $0x74] sm:$0xf]
        %v213 = vld [vmem:[%s157 + $0x78] sm:$0xf]
        %v214 = vld [vmem:[%s157 + $0x7c] sm:$0xf]
        %v215 = vld [vmem:[#allocation7] sm:$0xff]
        %v216 = vld [vmem:[#allocation7 + $0x8] sm:$0xff]
        %v217 = vld [vmem:[#allocation7 + $0x10] sm:$0xff]
        %v218 = vld [vmem:[#allocation7 + $0x18] sm:$0xff]
        %v219 = vld [vmem:[#allocation7 + $0x20] sm:$0xff]
        %v220 = vld [vmem:[#allocation7 + $0x28] sm:$0xff]
        %v221 = vld [vmem:[#allocation7 + $0x30] sm:$0xff]
        %v222 = vld [vmem:[#allocation7 + $0x38] sm:$0xff]
        %v223 = vld [vmem:[#allocation7 + $0x40] sm:$0xff]
        %v224 = vld [vmem:[#allocation7 + $0x48] sm:$0xff]
        %v225 = vld [vmem:[#allocation7 + $0x50] sm:$0xff]
        %v226 = vld [vmem:[#allocation7 + $0x58] sm:$0xff]
        %v227 = vld [vmem:[#allocation7 + $0x60] sm:$0xff]
        %v228 = vld [vmem:[#allocation7 + $0x68] sm:$0xff]
        %v229 = vld [vmem:[#allocation7 + $0x70] sm:$0xff]
        %v230 = vld [vmem:[#allocation7 + $0x78] sm:$0xff]
        %v231 = vld [vmem:[#allocation7 + $0x80] sm:$0xff]
        %v232 = vld [vmem:[#allocation7 + $0x88] sm:$0xff]
        %v233 = vld [vmem:[#allocation7 + $0x90] sm:$0xff]
        %v234 = vld [vmem:[#allocation7 + $0x98] sm:$0xff]
        %v235 = vld [vmem:[#allocation7 + $0xa0] sm:$0xff]
        %v236 = vld [vmem:[#allocation7 + $0xa8] sm:$0xff]
        %v237 = vld [vmem:[#allocation7 + $0xb0] sm:$0xff]
        %v238 = vld [vmem:[#allocation7 + $0xb8] sm:$0xff]
        %v239 = vld [vmem:[#allocation7 + $0xc0] sm:$0xff]
        %v240 = vld [vmem:[#allocation7 + $0xc8] sm:$0xff]
        %v241 = vld [vmem:[#allocation7 + $0xd0] sm:$0xff]
        %v242 = vld [vmem:[#allocation7 + $0xd8] sm:$0xff]
        %v243 = vld [vmem:[#allocation7 + $0xe0] sm:$0xff]
        %v244 = vld [vmem:[#allocation7 + $0xe8] sm:$0xff]
        %v245 = vld [vmem:[#allocation7 + $0xf0] sm:$0xff]
        %v246 = vld [vmem:[#allocation7 + $0xf8] sm:$0xff]
        %v279 = vunpack.c.l.b16 %v215
        %v280 = vunpack.c.h.b16 %v215
        %v281 = vunpack.c.l.b16 %v216
        %v282 = vunpack.c.h.b16 %v216
        %v283 = vunpack.c.l.b16 %v217
        %v284 = vunpack.c.h.b16 %v217
        %v285 = vunpack.c.l.b16 %v218
        %v286 = vunpack.c.h.b16 %v218
        %v287 = vunpack.c.l.b16 %v219
        %v288 = vunpack.c.h.b16 %v219
        %v289 = vunpack.c.l.b16 %v220
        %v290 = vunpack.c.h.b16 %v220
        %v291 = vunpack.c.l.b16 %v221
        %v292 = vunpack.c.h.b16 %v221
        %v293 = vunpack.c.l.b16 %v222
        %v294 = vunpack.c.h.b16 %v222
        %v295 = vunpack.c.l.b16 %v223
        %v296 = vunpack.c.h.b16 %v223
        %v297 = vunpack.c.l.b16 %v224
        %v298 = vunpack.c.h.b16 %v224
        %v299 = vunpack.c.l.b16 %v225
        %v300 = vunpack.c.h.b16 %v225
        %v301 = vunpack.c.l.b16 %v226
        %v302 = vunpack.c.h.b16 %v226
        %v303 = vunpack.c.l.b16 %v227
        %v304 = vunpack.c.h.b16 %v227
        %v305 = vunpack.c.l.b16 %v228
        %v306 = vunpack.c.h.b16 %v228
        %v307 = vunpack.c.l.b16 %v229
        %v308 = vunpack.c.h.b16 %v229
        %v309 = vunpack.c.l.b16 %v230
        %v310 = vunpack.c.h.b16 %v230
        %v311 = vunpack.c.l.b16 %v231
        %v312 = vunpack.c.h.b16 %v231
        %v313 = vunpack.c.l.b16 %v232
        %v314 = vunpack.c.h.b16 %v232
        %v315 = vunpack.c.l.b16 %v233
        %v316 = vunpack.c.h.b16 %v233
        %v317 = vunpack.c.l.b16 %v234
        %v318 = vunpack.c.h.b16 %v234
        %v319 = vunpack.c.l.b16 %v235
        %v320 = vunpack.c.h.b16 %v235
        %v321 = vunpack.c.l.b16 %v236
        %v322 = vunpack.c.h.b16 %v236
        %v323 = vunpack.c.l.b16 %v237
        %v324 = vunpack.c.h.b16 %v237
        %v325 = vunpack.c.l.b16 %v238
        %v326 = vunpack.c.h.b16 %v238
        %v327 = vunpack.c.l.b16 %v239
        %v328 = vunpack.c.h.b16 %v239
        %v329 = vunpack.c.l.b16 %v240
        %v330 = vunpack.c.h.b16 %v240
        %v331 = vunpack.c.l.b16 %v241
        %v332 = vunpack.c.h.b16 %v241
        %v333 = vunpack.c.l.b16 %v242
        %v334 = vunpack.c.h.b16 %v242
        %v335 = vunpack.c.l.b16 %v243
        %v336 = vunpack.c.h.b16 %v243
        %v337 = vunpack.c.l.b16 %v244
        %v338 = vunpack.c.h.b16 %v244
        %v339 = vunpack.c.l.b16 %v245
        %v340 = vunpack.c.h.b16 %v245
        %v341 = vunpack.c.l.b16 %v246
        %v342 = vunpack.c.h.b16 %v246
        %v343 = vpack.c.b16 %v281, %v279
        %v344 = vpack.c.b16 %v282, %v280
        %v345 = vpack.c.b16 %v285, %v283
        %v346 = vpack.c.b16 %v286, %v284
        %v347 = vpack.c.b16 %v289, %v287
        %v348 = vpack.c.b16 %v290, %v288
        %v349 = vpack.c.b16 %v293, %v291
        %v350 = vpack.c.b16 %v294, %v292
        %v351 = vpack.c.b16 %v297, %v295
        %v352 = vpack.c.b16 %v298, %v296
        %v353 = vpack.c.b16 %v301, %v299
        %v354 = vpack.c.b16 %v302, %v300
        %v355 = vpack.c.b16 %v305, %v303
        %v356 = vpack.c.b16 %v306, %v304
        %v357 = vpack.c.b16 %v309, %v307
        %v358 = vpack.c.b16 %v310, %v308
        %v359 = vpack.c.b16 %v313, %v311
        %v360 = vpack.c.b16 %v314, %v312
        %v361 = vpack.c.b16 %v317, %v315
        %v362 = vpack.c.b16 %v318, %v316
        %v363 = vpack.c.b16 %v321, %v319
        %v364 = vpack.c.b16 %v322, %v320
        %v365 = vpack.c.b16 %v325, %v323
        %v366 = vpack.c.b16 %v326, %v324
        %v367 = vpack.c.b16 %v329, %v327
        %v368 = vpack.c.b16 %v330, %v328
        %v369 = vpack.c.b16 %v333, %v331
        %v370 = vpack.c.b16 %v334, %v332
        %v371 = vpack.c.b16 %v337, %v335
        %v372 = vpack.c.b16 %v338, %v336
        %v373 = vpack.c.b16 %v341, %v339
        %v374 = vpack.c.b16 %v342, %v340
        %v439 = vunpack.c.l.b16 %v183
        %v440 = vunpack.c.l.b16 %v184
        %v441 = vunpack.c.l.b16 %v185
        %v442 = vunpack.c.l.b16 %v186
        %v443 = vunpack.c.l.b16 %v187
        %v444 = vunpack.c.l.b16 %v188
        %v445 = vunpack.c.l.b16 %v189
        %v446 = vunpack.c.l.b16 %v190
        %v447 = vunpack.c.l.b16 %v191
        %v448 = vunpack.c.l.b16 %v192
        %v449 = vunpack.c.l.b16 %v193
        %v450 = vunpack.c.l.b16 %v194
        %v451 = vunpack.c.l.b16 %v195
        %v452 = vunpack.c.l.b16 %v196
        %v453 = vunpack.c.l.b16 %v197
        %v454 = vunpack.c.l.b16 %v198
        %v455 = vunpack.c.l.b16 %v199
        %v456 = vunpack.c.l.b16 %v200
        %v457 = vunpack.c.l.b16 %v201
        %v458 = vunpack.c.l.b16 %v202
        %v459 = vunpack.c.l.b16 %v203
        %v460 = vunpack.c.l.b16 %v204
        %v461 = vunpack.c.l.b16 %v205
        %v462 = vunpack.c.l.b16 %v206
        %v463 = vunpack.c.l.b16 %v207
        %v464 = vunpack.c.l.b16 %v208
        %v465 = vunpack.c.l.b16 %v209
        %v466 = vunpack.c.l.b16 %v210
        %v467 = vunpack.c.l.b16 %v211
        %v468 = vunpack.c.l.b16 %v212
        %v469 = vunpack.c.l.b16 %v213
        %v470 = vunpack.c.l.b16 %v214
        %v471 = vpack.c.b16 %v440, %v439
        %v472 = vpack.c.b16 %v442, %v441
        %v473 = vpack.c.b16 %v444, %v443
        %v474 = vpack.c.b16 %v446, %v445
        %v475 = vpack.c.b16 %v448, %v447
        %v476 = vpack.c.b16 %v450, %v449
        %v477 = vpack.c.b16 %v452, %v451
        %v478 = vpack.c.b16 %v454, %v453
        %v479 = vpack.c.b16 %v456, %v455
        %v480 = vpack.c.b16 %v458, %v457
        %v481 = vpack.c.b16 %v460, %v459
        %v482 = vpack.c.b16 %v462, %v461
        %v483 = vpack.c.b16 %v464, %v463
        %v484 = vpack.c.b16 %v466, %v465
        %v485 = vpack.c.b16 %v468, %v467
        %v486 = vpack.c.b16 %v470, %v469
        %503 = vmatprep.subr.bf16.mxu0 0
        %504 = vmatpush1.bf16.msra.mxu0 %v478
        %505 = vmatprep.subr.bf16.mxu0 0
        %506 = vmatpush1.bf16.msra.mxu0 %v477
        %507 = vmatprep.subr.bf16.mxu0 0
        %508 = vmatpush1.bf16.msra.mxu0 %v476
        %509 = vmatprep.subr.bf16.mxu0 0
        %510 = vmatpush1.bf16.msra.mxu0 %v475
        %511 = vmatprep.subr.bf16.mxu0 0
        %512 = vmatpush1.bf16.msra.mxu0 %v474
        %513 = vmatprep.subr.bf16.mxu0 0
        %514 = vmatpush1.bf16.msra.mxu0 %v473
        %515 = vmatprep.subr.bf16.mxu0 0
        %516 = vmatpush1.bf16.msra.mxu0 %v472
        %517 = vmatprep.subr.bf16.mxu0 0
        %518 = vmatpush1.bf16.msra.mxu0 %v471
        %519 = vmatprep.subr.bf16.mxu0 0
        %520 = vmatpush2.bf16.msra.mxu0 %v486
        %521 = vmatprep.subr.bf16.mxu0 0
        %522 = vmatpush2.bf16.msra.mxu0 %v485
        %523 = vmatprep.subr.bf16.mxu0 0
        %524 = vmatpush2.bf16.msra.mxu0 %v484
        %525 = vmatprep.subr.bf16.mxu0 0
        %526 = vmatpush2.bf16.msra.mxu0 %v483
        %527 = vmatprep.subr.bf16.mxu0 0
        %528 = vmatpush2.bf16.msra.mxu0 %v482
        %529 = vmatprep.subr.bf16.mxu0 0
        %530 = vmatpush2.bf16.msra.mxu0 %v481
        %531 = vmatprep.subr.bf16.mxu0 0
        %532 = vmatpush2.bf16.msra.mxu0 %v480
        %533 = vmatprep.subr.bf16.mxu0 0
        %534 = vmatpush2.bf16.msra.mxu0 %v479
        %535 = vmatprep.mubr.bf16.mxu0 %v344
        %536 = vmatmul.mubr.bf16.gmra.mxu0 %v343
        %v537 = vpop.f32.mrf.mxu0
        %v538 = vadd.f32 0.0, %v537
        %v539 = vpop.f32.mrf.mxu0
        %v540 = vpop.f32.mrf.mxu0
        %v541 = vadd.f32 0.0, %v540
        %v542 = vpop.f32.mrf.mxu0
        %543 = vmatprep.mubr.bf16.mxu0 %v346
        %544 = vmatmul.mubr.bf16.gmra.mxu0 %v345
        %v545 = vpop.f32.mrf.mxu0
        %v546 = vadd.f32 0.0, %v545
        %v547 = vpop.f32.mrf.mxu0
        %v548 = vpop.f32.mrf.mxu0
        %v549 = vadd.f32 0.0, %v548
        %v550 = vpop.f32.mrf.mxu0
        %551 = vmatprep.mubr.bf16.mxu0 %v348
        %552 = vmatmul.mubr.bf16.gmra.mxu0 %v347
        %v553 = vpop.f32.mrf.mxu0
        %v554 = vadd.f32 0.0, %v553
        %v555 = vpop.f32.mrf.mxu0
        %v556 = vpop.f32.mrf.mxu0
        %v557 = vadd.f32 0.0, %v556
        %v558 = vpop.f32.mrf.mxu0
        %559 = vmatprep.mubr.bf16.mxu0 %v350
        %560 = vmatmul.mubr.bf16.gmra.mxu0 %v349
        %v561 = vpop.f32.mrf.mxu0
        %v562 = vadd.f32 0.0, %v561
        %v563 = vpop.f32.mrf.mxu0
        %v564 = vpop.f32.mrf.mxu0
        %v565 = vadd.f32 0.0, %v564
        %v566 = vpop.f32.mrf.mxu0
        %567 = vmatprep.mubr.bf16.mxu0 %v352
        %568 = vmatmul.mubr.bf16.gmra.mxu0 %v351
        %v569 = vpop.f32.mrf.mxu0
        %v570 = vadd.f32 0.0, %v569
        %v571 = vpop.f32.mrf.mxu0
        %v572 = vpop.f32.mrf.mxu0
        %v573 = vadd.f32 0.0, %v572
        %v574 = vpop.f32.mrf.mxu0
        %575 = vmatprep.mubr.bf16.mxu0 %v354
        %576 = vmatmul.mubr.bf16.gmra.mxu0 %v353
        %v577 = vpop.f32.mrf.mxu0
        %v578 = vadd.f32 0.0, %v577
        %v579 = vpop.f32.mrf.mxu0
        %v580 = vpop.f32.mrf.mxu0
        %v581 = vadd.f32 0.0, %v580
        %v582 = vpop.f32.mrf.mxu0
        %583 = vmatprep.mubr.bf16.mxu0 %v356
        %584 = vmatmul.mubr.bf16.gmra.mxu0 %v355
        %v585 = vpop.f32.mrf.mxu0
        %v586 = vadd.f32 0.0, %v585
        %v587 = vpop.f32.mrf.mxu0
        %v588 = vpop.f32.mrf.mxu0
        %v589 = vadd.f32 0.0, %v588
        %v590 = vpop.f32.mrf.mxu0
        %591 = vmatprep.mubr.bf16.mxu0 %v358
        %592 = vmatmul.mubr.bf16.gmra.mxu0 %v357
        %v593 = vpop.f32.mrf.mxu0
        %v594 = vadd.f32 0.0, %v593
        %v595 = vpop.f32.mrf.mxu0
        %v596 = vpop.f32.mrf.mxu0
        %v597 = vadd.f32 0.0, %v596
        %v598 = vpop.f32.mrf.mxu0
        %599 = vmatprep.mubr.bf16.mxu0 %v360
        %600 = vmatmul.mubr.bf16.gmra.mxu0 %v359
        %v601 = vpop.f32.mrf.mxu0
        %v602 = vadd.f32 0.0, %v601
        %v603 = vpop.f32.mrf.mxu0
        %v604 = vpop.f32.mrf.mxu0
        %v605 = vadd.f32 0.0, %v604
        %v606 = vpop.f32.mrf.mxu0
        %607 = vmatprep.mubr.bf16.mxu0 %v362
        %608 = vmatmul.mubr.bf16.gmra.mxu0 %v361
        %v609 = vpop.f32.mrf.mxu0
        %v610 = vadd.f32 0.0, %v609
        %v611 = vpop.f32.mrf.mxu0
        %v612 = vpop.f32.mrf.mxu0
        %v613 = vadd.f32 0.0, %v612
        %v614 = vpop.f32.mrf.mxu0
        %615 = vmatprep.mubr.bf16.mxu0 %v364
        %616 = vmatmul.mubr.bf16.gmra.mxu0 %v363
        %v617 = vpop.f32.mrf.mxu0
        %v618 = vadd.f32 0.0, %v617
        %v619 = vpop.f32.mrf.mxu0
        %v620 = vpop.f32.mrf.mxu0
        %v621 = vadd.f32 0.0, %v620
        %v622 = vpop.f32.mrf.mxu0
        %623 = vmatprep.mubr.bf16.mxu0 %v366
        %624 = vmatmul.mubr.bf16.gmra.mxu0 %v365
        %v625 = vpop.f32.mrf.mxu0
        %v626 = vadd.f32 0.0, %v625
        %v627 = vpop.f32.mrf.mxu0
        %v628 = vpop.f32.mrf.mxu0
        %v629 = vadd.f32 0.0, %v628
        %v630 = vpop.f32.mrf.mxu0
        %631 = vmatprep.mubr.bf16.mxu0 %v368
        %632 = vmatmul.mubr.bf16.gmra.mxu0 %v367
        %v633 = vpop.f32.mrf.mxu0
        %v634 = vadd.f32 0.0, %v633
        %v635 = vpop.f32.mrf.mxu0
        %v636 = vpop.f32.mrf.mxu0
        %v637 = vadd.f32 0.0, %v636
        %v638 = vpop.f32.mrf.mxu0
        %639 = vmatprep.mubr.bf16.mxu0 %v370
        %640 = vmatmul.mubr.bf16.gmra.mxu0 %v369
        %v641 = vpop.f32.mrf.mxu0
        %v642 = vadd.f32 0.0, %v641
        %v643 = vpop.f32.mrf.mxu0
        %v644 = vpop.f32.mrf.mxu0
        %v645 = vadd.f32 0.0, %v644
        %v646 = vpop.f32.mrf.mxu0
        %647 = vmatprep.mubr.bf16.mxu0 %v372
        %648 = vmatmul.mubr.bf16.gmra.mxu0 %v371
        %v649 = vpop.f32.mrf.mxu0
        %v650 = vadd.f32 0.0, %v649
        %v651 = vpop.f32.mrf.mxu0
        %v652 = vpop.f32.mrf.mxu0
        %v653 = vadd.f32 0.0, %v652
        %v654 = vpop.f32.mrf.mxu0
        %655 = vmatprep.mubr.bf16.mxu0 %v374
        %656 = vmatmul.mubr.bf16.gmra.mxu0 %v373
        %v657 = vpop.f32.mrf.mxu0
        %v658 = vadd.f32 0.0, %v657
        %v659 = vpop.f32.mrf.mxu0
        %v660 = vpop.f32.mrf.mxu0
        %v661 = vadd.f32 0.0, %v660
        %v662 = vpop.f32.mrf.mxu0
        %663 = vdwg.mxu0
        %v664 = vmul.f32 %v538, %v538
        %v665 = vmul.f32 %v541, %v541
        %v666 = vmul.f32 %v546, %v546
        %v667 = vmul.f32 %v549, %v549
        %v668 = vmul.f32 %v554, %v554
        %v669 = vmul.f32 %v557, %v557
        %v670 = vmul.f32 %v562, %v562
        %v671 = vmul.f32 %v565, %v565
        %v672 = vmul.f32 %v570, %v570
        %v673 = vmul.f32 %v573, %v573
        %v674 = vmul.f32 %v578, %v578
        %v675 = vmul.f32 %v581, %v581
        %v676 = vmul.f32 %v586, %v586
        %v677 = vmul.f32 %v589, %v589
        %v678 = vmul.f32 %v594, %v594
        %v679 = vmul.f32 %v597, %v597
        %v680 = vmul.f32 %v602, %v602
        %v681 = vmul.f32 %v605, %v605
        %v682 = vmul.f32 %v610, %v610
        %v683 = vmul.f32 %v613, %v613
        %v684 = vmul.f32 %v618, %v618
        %v685 = vmul.f32 %v621, %v621
        %v686 = vmul.f32 %v626, %v626
        %v687 = vmul.f32 %v629, %v629
        %v688 = vmul.f32 %v634, %v634
        %v689 = vmul.f32 %v637, %v637
        %v690 = vmul.f32 %v642, %v642
        %v691 = vmul.f32 %v645, %v645
        %v692 = vmul.f32 %v650, %v650
        %v693 = vmul.f32 %v653, %v653
        %v694 = vmul.f32 %v658, %v658
        %v695 = vmul.f32 %v661, %v661
        %v696 = vlaneseq
        %v697 = vshrl.u32 %v696, 7
        %v698 = vadd.s32 %v697, 8
        %v699 = vadd.s32 %v697, 16
        %v700 = vadd.s32 %v697, 24
        %v701 = vadd.s32 %v697, 32
        %v702 = vadd.s32 %v697, 40
        %v703 = vadd.s32 %v697, 48
        %v704 = vadd.s32 %v697, 56
        %v705 = vadd.s32 %v697, 64
        %v706 = vadd.s32 %v697, 72
        %v707 = vadd.s32 %v697, 80
        %v708 = vadd.s32 %v697, 88
        %v709 = vadd.s32 %v697, 96
        %v710 = vadd.s32 %v697, 104
        %v711 = vadd.s32 %v697, 112
        %v712 = vadd.s32 %v697, 120
        %vm713 = vcmp.ge.s32.totalorder %v697, 1
        %vm714 = vcmp.ge.s32.totalorder %v698, 1
        %vm715 = vcmp.ge.s32.totalorder %v699, 1
        %vm716 = vcmp.ge.s32.totalorder %v700, 1
        %vm717 = vcmp.ge.s32.totalorder %v701, 1
        %vm718 = vcmp.ge.s32.totalorder %v702, 1
        %vm719 = vcmp.ge.s32.totalorder %v703, 1
        %vm720 = vcmp.ge.s32.totalorder %v704, 1
        %vm721 = vcmp.ge.s32.totalorder %v705, 1
        %vm722 = vcmp.ge.s32.totalorder %v706, 1
        %vm723 = vcmp.ge.s32.totalorder %v707, 1
        %vm724 = vcmp.ge.s32.totalorder %v708, 1
        %vm725 = vcmp.ge.s32.totalorder %v709, 1
        %vm726 = vcmp.ge.s32.totalorder %v710, 1
        %vm727 = vcmp.ge.s32.totalorder %v711, 1
        %vm728 = vcmp.ge.s32.totalorder %v712, 1
        %v729 = vsel %vm713, 1, 0
        %v730 = vsel %vm714, 1, 0
        %v731 = vsel %vm715, 1, 0
        %v732 = vsel %vm716, 1, 0
        %v733 = vsel %vm717, 1, 0
        %v734 = vsel %vm718, 1, 0
        %v735 = vsel %vm719, 1, 0
        %v736 = vsel %vm720, 1, 0
        %v737 = vsel %vm721, 1, 0
        %v738 = vsel %vm722, 1, 0
        %v739 = vsel %vm723, 1, 0
        %v740 = vsel %vm724, 1, 0
        %v741 = vsel %vm725, 1, 0
        %v742 = vsel %vm726, 1, 0
        %v743 = vsel %vm727, 1, 0
        %v744 = vsel %vm728, 1, 0
        %vm745 = vcmp.eq.s32.totalorder %v729, 1
        %vm746 = vcmp.eq.s32.totalorder %v730, 1
        %vm747 = vcmp.eq.s32.totalorder %v731, 1
        %vm748 = vcmp.eq.s32.totalorder %v732, 1
        %vm749 = vcmp.eq.s32.totalorder %v733, 1
        %vm750 = vcmp.eq.s32.totalorder %v734, 1
        %vm751 = vcmp.eq.s32.totalorder %v735, 1
        %vm752 = vcmp.eq.s32.totalorder %v736, 1
        %vm753 = vcmp.eq.s32.totalorder %v737, 1
        %vm754 = vcmp.eq.s32.totalorder %v738, 1
        %vm755 = vcmp.eq.s32.totalorder %v739, 1
        %vm756 = vcmp.eq.s32.totalorder %v740, 1
        %vm757 = vcmp.eq.s32.totalorder %v741, 1
        %vm758 = vcmp.eq.s32.totalorder %v742, 1
        %vm759 = vcmp.eq.s32.totalorder %v743, 1
        %vm760 = vcmp.eq.s32.totalorder %v744, 1
        %v761 = vsel %vm745, %v680, 0.0
        %v762 = vsel %vm746, %v681, 0.0
        %v763 = vsel %vm747, %v682, 0.0
        %v764 = vsel %vm748, %v683, 0.0
        %v765 = vsel %vm749, %v684, 0.0
        %v766 = vsel %vm750, %v685, 0.0
        %v767 = vsel %vm751, %v686, 0.0
        %v768 = vsel %vm752, %v687, 0.0
        %v769 = vsel %vm753, %v688, 0.0
        %v770 = vsel %vm754, %v689, 0.0
        %v771 = vsel %vm755, %v690, 0.0
        %v772 = vsel %vm756, %v691, 0.0
        %v773 = vsel %vm757, %v692, 0.0
        %v774 = vsel %vm758, %v693, 0.0
        %v775 = vsel %vm759, %v694, 0.0
        %v776 = vsel %vm760, %v695, 0.0
        %v777 = vadd.f32 %v664, %v761
        %v778 = vadd.f32 %v665, %v762
        %v779 = vadd.f32 %v666, %v763
        %v780 = vadd.f32 %v667, %v764
        %v781 = vadd.f32 %v668, %v765
        %v782 = vadd.f32 %v669, %v766
        %v783 = vadd.f32 %v670, %v767
        %v784 = vadd.f32 %v671, %v768
        %v785 = vadd.f32 %v672, %v769
        %v786 = vadd.f32 %v673, %v770
        %v787 = vadd.f32 %v674, %v771
        %v788 = vadd.f32 %v675, %v772
        %v789 = vadd.f32 %v676, %v773
        %v790 = vadd.f32 %v677, %v774
        %v791 = vadd.f32 %v678, %v775
        %v792 = vadd.f32 %v679, %v776
        %v793 = vadd.f32 %v777, 1e-30
        %v794 = vadd.f32 %v778, 1e-30
        %v795 = vadd.f32 %v779, 1e-30
        %v796 = vadd.f32 %v780, 1e-30
        %v797 = vadd.f32 %v781, 1e-30
        %v798 = vadd.f32 %v782, 1e-30
        %v799 = vadd.f32 %v783, 1e-30
        %v800 = vadd.f32 %v784, 1e-30
        %v801 = vadd.f32 %v785, 1e-30
        %v802 = vadd.f32 %v786, 1e-30
        %v803 = vadd.f32 %v787, 1e-30
        %v804 = vadd.f32 %v788, 1e-30
        %v805 = vadd.f32 %v789, 1e-30
        %v806 = vadd.f32 %v790, 1e-30
        %v807 = vadd.f32 %v791, 1e-30
        %v808 = vadd.f32 %v792, 1e-30
        %v809 = vadd.f32 %v680, 1e-30
        %v810 = vlog2.pop %v793
        %v811 = vmul.f32 %v810, 0.6931472
        %v812 = vlog2.pop %v794
        %v813 = vmul.f32 %v812, 0.6931472
        %v814 = vlog2.pop %v795
        %v815 = vmul.f32 %v814, 0.6931472
        %v816 = vlog2.pop %v796
        %v817 = vmul.f32 %v816, 0.6931472
        %v818 = vlog2.pop %v797
        %v819 = vmul.f32 %v818, 0.6931472
        %v820 = vlog2.pop %v798
        %v821 = vmul.f32 %v820, 0.6931472
        %v822 = vlog2.pop %v799
        %v823 = vmul.f32 %v822, 0.6931472
        %v824 = vlog2.pop %v800
        %v825 = vmul.f32 %v824, 0.6931472
        %v826 = vlog2.pop %v801
        %v827 = vmul.f32 %v826, 0.6931472
        %v828 = vlog2.pop %v802
        %v829 = vmul.f32 %v828, 0.6931472
        %v830 = vlog2.pop %v803
        %v831 = vmul.f32 %v830, 0.6931472
        %v832 = vlog2.pop %v804
        %v833 = vmul.f32 %v832, 0.6931472
        %v834 = vlog2.pop %v805
        %v835 = vmul.f32 %v834, 0.6931472
        %v836 = vlog2.pop %v806
        %v837 = vmul.f32 %v836, 0.6931472
        %v838 = vlog2.pop %v807
        %v839 = vmul.f32 %v838, 0.6931472
        %v840 = vlog2.pop %v808
        %v841 = vmul.f32 %v840, 0.6931472
        %v842 = vlog2.pop %v809
        %v843 = vmul.f32 %v842, 0.6931472
        %v844 = vmul.f32 %v811, 0.5
        %v845 = vmul.f32 %v813, 0.5
        %v846 = vmul.f32 %v815, 0.5
        %v847 = vmul.f32 %v817, 0.5
        %v848 = vmul.f32 %v819, 0.5
        %v849 = vmul.f32 %v821, 0.5
        %v850 = vmul.f32 %v823, 0.5
        %v851 = vmul.f32 %v825, 0.5
        %v852 = vmul.f32 %v827, 0.5
        %v853 = vmul.f32 %v829, 0.5
        %v854 = vmul.f32 %v831, 0.5
        %v855 = vmul.f32 %v833, 0.5
        %v856 = vmul.f32 %v835, 0.5
        %v857 = vmul.f32 %v837, 0.5
        %v858 = vmul.f32 %v839, 0.5
        %v859 = vmul.f32 %v841, 0.5
        %v860 = vmul.f32 %v843, 0.5
        %s861 = sld [smem:[#allocation3 + %s25]]
        %s862 = scvt.s32.f32 %s861
        %v863 = vlaneseq
        %v864 = vand.u32 %v863, 127
        %v865 = vstv %s861
        %vm866 = vcmp.lt.s32.totalorder %v864, %v865
        %s867 = smax.f32 %s862, 1.0
        %v868 = vstv %s867
        %v869 = vrcp.pop %v868
        %s870 = vtos %v869
        %v871 = vsel %vm866, 1, 0
        %vm872 = vcmp.eq.s32.totalorder %v871, 1
        %v873 = vsel %vm872, %v844, 0.0
        %v874 = vsel %vm872, %v845, 0.0
        %v875 = vsel %vm872, %v846, 0.0
        %v876 = vsel %vm872, %v847, 0.0
        %v877 = vsel %vm872, %v848, 0.0
        %v878 = vsel %vm872, %v849, 0.0
        %v879 = vsel %vm872, %v850, 0.0
        %v880 = vsel %vm872, %v851, 0.0
        %v881 = vsel %vm872, %v852, 0.0
        %v882 = vsel %vm872, %v853, 0.0
        %v883 = vsel %vm872, %v854, 0.0
        %v884 = vsel %vm872, %v855, 0.0
        %v885 = vsel %vm872, %v856, 0.0
        %v886 = vsel %vm872, %v857, 0.0
        %v887 = vsel %vm872, %v858, 0.0
        %v888 = vsel %vm872, %v859, 0.0
        %v889 = vsel %vm872, %v860, 0.0
        %890 = vadd.xlane.f32.xlu0 %v873
        %v891 = vpop.xlane.xlu0 %890
        %892 = vadd.xlane.f32.xlu0 %v874
        %v893 = vpop.xlane.xlu0 %892
        %894 = vadd.xlane.f32.xlu0 %v875
        %v895 = vpop.xlane.xlu0 %894
        %896 = vadd.xlane.f32.xlu0 %v876
        %v897 = vpop.xlane.xlu0 %896
        %898 = vadd.xlane.f32.xlu0 %v877
        %v899 = vpop.xlane.xlu0 %898
        %900 = vadd.xlane.f32.xlu0 %v878
        %v901 = vpop.xlane.xlu0 %900
        %902 = vadd.xlane.f32.xlu0 %v879
        %v903 = vpop.xlane.xlu0 %902
        %904 = vadd.xlane.f32.xlu0 %v880
        %v905 = vpop.xlane.xlu0 %904
        %906 = vadd.xlane.f32.xlu0 %v881
        %v907 = vpop.xlane.xlu0 %906
        %908 = vadd.xlane.f32.xlu0 %v882
        %v909 = vpop.xlane.xlu0 %908
        %910 = vadd.xlane.f32.xlu0 %v883
        %v911 = vpop.xlane.xlu0 %910
        %912 = vadd.xlane.f32.xlu0 %v884
        %v913 = vpop.xlane.xlu0 %912
        %914 = vadd.xlane.f32.xlu0 %v885
        %v915 = vpop.xlane.xlu0 %914
        %916 = vadd.xlane.f32.xlu0 %v886
        %v917 = vpop.xlane.xlu0 %916
        %918 = vadd.xlane.f32.xlu0 %v887
        %v919 = vpop.xlane.xlu0 %918
        %920 = vadd.xlane.f32.xlu0 %v888
        %v921 = vpop.xlane.xlu0 %920
        %922 = vadd.xlane.f32.xlu0 %v889
        %v923 = vpop.xlane.xlu0 %922
        %v924 = vstv %s870
        %v925 = vmul.f32 %v891, %v924
        %v926 = vmul.f32 %v893, %v924
        %v927 = vmul.f32 %v895, %v924
        %v928 = vmul.f32 %v897, %v924
        %v929 = vmul.f32 %v899, %v924
        %v930 = vmul.f32 %v901, %v924
        %v931 = vmul.f32 %v903, %v924
        %v932 = vmul.f32 %v905, %v924
        %v933 = vmul.f32 %v907, %v924
        %v934 = vmul.f32 %v909, %v924
        %v935 = vmul.f32 %v911, %v924
        %v936 = vmul.f32 %v913, %v924
        %v937 = vmul.f32 %v915, %v924
        %v938 = vmul.f32 %v917, %v924
        %v939 = vmul.f32 %v919, %v924
        %v940 = vmul.f32 %v921, %v924
        %v941 = vmul.f32 %v923, %v924
        %v942 = vsub.f32 %v844, %v925
        %v943 = vsub.f32 %v845, %v926
        %v944 = vsub.f32 %v846, %v927
        %v945 = vsub.f32 %v847, %v928
        %v946 = vsub.f32 %v848, %v929
        %v947 = vsub.f32 %v849, %v930
        %v948 = vsub.f32 %v850, %v931
        %v949 = vsub.f32 %v851, %v932
        %v950 = vsub.f32 %v852, %v933
        %v951 = vsub.f32 %v853, %v934
        %v952 = vsub.f32 %v854, %v935
        %v953 = vsub.f32 %v855, %v936
        %v954 = vsub.f32 %v856, %v937
        %v955 = vsub.f32 %v857, %v938
        %v956 = vsub.f32 %v858, %v939
        %v957 = vsub.f32 %v859, %v940
        %v958 = vsub.f32 %v860, %v941
        %s959 = ssub.f32 %s862, 1.0
        %s960 = smax.f32 %s959, 1.0
        %v961 = vstv %s960
        %v962 = vrcp.pop %v961
        %s963 = vtos %v962
        %v964 = vmul.f32 %v942, %v942
        %v965 = vmul.f32 %v943, %v943
        %v966 = vmul.f32 %v944, %v944
        %v967 = vmul.f32 %v945, %v945
        %v968 = vmul.f32 %v946, %v946
        %v969 = vmul.f32 %v947, %v947
        %v970 = vmul.f32 %v948, %v948
        %v971 = vmul.f32 %v949, %v949
        %v972 = vmul.f32 %v950, %v950
        %v973 = vmul.f32 %v951, %v951
        %v974 = vmul.f32 %v952, %v952
        %v975 = vmul.f32 %v953, %v953
        %v976 = vmul.f32 %v954, %v954
        %v977 = vmul.f32 %v955, %v955
        %v978 = vmul.f32 %v956, %v956
        %v979 = vmul.f32 %v957, %v957
        %v980 = vmul.f32 %v958, %v958
        %v981 = vsel %vm872, %v964, 0.0
        %v982 = vsel %vm872, %v965, 0.0
        %v983 = vsel %vm872, %v966, 0.0
        %v984 = vsel %vm872, %v967, 0.0
        %v985 = vsel %vm872, %v968, 0.0
        %v986 = vsel %vm872, %v969, 0.0
        %v987 = vsel %vm872, %v970, 0.0
        %v988 = vsel %vm872, %v971, 0.0
        %v989 = vsel %vm872, %v972, 0.0
        %v990 = vsel %vm872, %v973, 0.0
        %v991 = vsel %vm872, %v974, 0.0
        %v992 = vsel %vm872, %v975, 0.0
        %v993 = vsel %vm872, %v976, 0.0
        %v994 = vsel %vm872, %v977, 0.0
        %v995 = vsel %vm872, %v978, 0.0
        %v996 = vsel %vm872, %v979, 0.0
        %v997 = vsel %vm872, %v980, 0.0
        %998 = vadd.xlane.f32.xlu0 %v981
        %v999 = vpop.xlane.xlu0 %998
        %1000 = vadd.xlane.f32.xlu0 %v982
        %v1001 = vpop.xlane.xlu0 %1000
        %1002 = vadd.xlane.f32.xlu0 %v983
        %v1003 = vpop.xlane.xlu0 %1002
        %1004 = vadd.xlane.f32.xlu0 %v984
        %v1005 = vpop.xlane.xlu0 %1004
        %1006 = vadd.xlane.f32.xlu0 %v985
        %v1007 = vpop.xlane.xlu0 %1006
        %1008 = vadd.xlane.f32.xlu0 %v986
        %v1009 = vpop.xlane.xlu0 %1008
        %1010 = vadd.xlane.f32.xlu0 %v987
        %v1011 = vpop.xlane.xlu0 %1010
        %1012 = vadd.xlane.f32.xlu0 %v988
        %v1013 = vpop.xlane.xlu0 %1012
        %1014 = vadd.xlane.f32.xlu0 %v989
        %v1015 = vpop.xlane.xlu0 %1014
        %1016 = vadd.xlane.f32.xlu0 %v990
        %v1017 = vpop.xlane.xlu0 %1016
        %1018 = vadd.xlane.f32.xlu0 %v991
        %v1019 = vpop.xlane.xlu0 %1018
        %1020 = vadd.xlane.f32.xlu0 %v992
        %v1021 = vpop.xlane.xlu0 %1020
        %1022 = vadd.xlane.f32.xlu0 %v993
        %v1023 = vpop.xlane.xlu0 %1022
        %1024 = vadd.xlane.f32.xlu0 %v994
        %v1025 = vpop.xlane.xlu0 %1024
        %1026 = vadd.xlane.f32.xlu0 %v995
        %v1027 = vpop.xlane.xlu0 %1026
        %1028 = vadd.xlane.f32.xlu0 %v996
        %v1029 = vpop.xlane.xlu0 %1028
        %1030 = vadd.xlane.f32.xlu0 %v997
        %v1031 = vpop.xlane.xlu0 %1030
        %v1032 = vstv %s963
        %v1033 = vmul.f32 %v999, %v1032
        %v1034 = vmul.f32 %v1001, %v1032
        %v1035 = vmul.f32 %v1003, %v1032
        %v1036 = vmul.f32 %v1005, %v1032
        %v1037 = vmul.f32 %v1007, %v1032
        %v1038 = vmul.f32 %v1009, %v1032
        %v1039 = vmul.f32 %v1011, %v1032
        %v1040 = vmul.f32 %v1013, %v1032
        %v1041 = vmul.f32 %v1015, %v1032
        %v1042 = vmul.f32 %v1017, %v1032
        %v1043 = vmul.f32 %v1019, %v1032
        %v1044 = vmul.f32 %v1021, %v1032
        %v1045 = vmul.f32 %v1023, %v1032
        %v1046 = vmul.f32 %v1025, %v1032
        %v1047 = vmul.f32 %v1027, %v1032
        %v1048 = vmul.f32 %v1029, %v1032
        %v1049 = vmul.f32 %v1031, %v1032
        %v1050 = vrsqrt.pop %v1033
        %v1051 = vmul.f32 %v1033, %v1050
        %vm1052 = vcmp.eq.f32.partialorder %v1033, inf
        %v1053 = vsel %vm1052, %v1033, %v1051
        %vm1054 = vcmp.eq.f32.partialorder %v1033, 0.0
        %v1055 = vand.u32 %v1033, 2147483648
        %v1056 = vsel %vm1054, %v1055, %v1053
        %v1057 = vrsqrt.pop %v1034
        %v1058 = vmul.f32 %v1034, %v1057
        %vm1059 = vcmp.eq.f32.partialorder %v1034, inf
        %v1060 = vsel %vm1059, %v1034, %v1058
        %vm1061 = vcmp.eq.f32.partialorder %v1034, 0.0
        %v1062 = vand.u32 %v1034, 2147483648
        %v1063 = vsel %vm1061, %v1062, %v1060
        %v1064 = vrsqrt.pop %v1035
        %v1065 = vmul.f32 %v1035, %v1064
        %vm1066 = vcmp.eq.f32.partialorder %v1035, inf
        %v1067 = vsel %vm1066, %v1035, %v1065
        %vm1068 = vcmp.eq.f32.partialorder %v1035, 0.0
        %v1069 = vand.u32 %v1035, 2147483648
        %v1070 = vsel %vm1068, %v1069, %v1067
        %v1071 = vrsqrt.pop %v1036
        %v1072 = vmul.f32 %v1036, %v1071
        %vm1073 = vcmp.eq.f32.partialorder %v1036, inf
        %v1074 = vsel %vm1073, %v1036, %v1072
        %vm1075 = vcmp.eq.f32.partialorder %v1036, 0.0
        %v1076 = vand.u32 %v1036, 2147483648
        %v1077 = vsel %vm1075, %v1076, %v1074
        %v1078 = vrsqrt.pop %v1037
        %v1079 = vmul.f32 %v1037, %v1078
        %vm1080 = vcmp.eq.f32.partialorder %v1037, inf
        %v1081 = vsel %vm1080, %v1037, %v1079
        %vm1082 = vcmp.eq.f32.partialorder %v1037, 0.0
        %v1083 = vand.u32 %v1037, 2147483648
        %v1084 = vsel %vm1082, %v1083, %v1081
        %v1085 = vrsqrt.pop %v1038
        %v1086 = vmul.f32 %v1038, %v1085
        %vm1087 = vcmp.eq.f32.partialorder %v1038, inf
        %v1088 = vsel %vm1087, %v1038, %v1086
        %vm1089 = vcmp.eq.f32.partialorder %v1038, 0.0
        %v1090 = vand.u32 %v1038, 2147483648
        %v1091 = vsel %vm1089, %v1090, %v1088
        %v1092 = vrsqrt.pop %v1039
        %v1093 = vmul.f32 %v1039, %v1092
        %vm1094 = vcmp.eq.f32.partialorder %v1039, inf
        %v1095 = vsel %vm1094, %v1039, %v1093
        %vm1096 = vcmp.eq.f32.partialorder %v1039, 0.0
        %v1097 = vand.u32 %v1039, 2147483648
        %v1098 = vsel %vm1096, %v1097, %v1095
        %v1099 = vrsqrt.pop %v1040
        %v1100 = vmul.f32 %v1040, %v1099
        %vm1101 = vcmp.eq.f32.partialorder %v1040, inf
        %v1102 = vsel %vm1101, %v1040, %v1100
        %vm1103 = vcmp.eq.f32.partialorder %v1040, 0.0
        %v1104 = vand.u32 %v1040, 2147483648
        %v1105 = vsel %vm1103, %v1104, %v1102
        %v1106 = vrsqrt.pop %v1041
        %v1107 = vmul.f32 %v1041, %v1106
        %vm1108 = vcmp.eq.f32.partialorder %v1041, inf
        %v1109 = vsel %vm1108, %v1041, %v1107
        %vm1110 = vcmp.eq.f32.partialorder %v1041, 0.0
        %v1111 = vand.u32 %v1041, 2147483648
        %v1112 = vsel %vm1110, %v1111, %v1109
        %v1113 = vrsqrt.pop %v1042
        %v1114 = vmul.f32 %v1042, %v1113
        %vm1115 = vcmp.eq.f32.partialorder %v1042, inf
        %v1116 = vsel %vm1115, %v1042, %v1114
        %vm1117 = vcmp.eq.f32.partialorder %v1042, 0.0
        %v1118 = vand.u32 %v1042, 2147483648
        %v1119 = vsel %vm1117, %v1118, %v1116
        %v1120 = vrsqrt.pop %v1043
        %v1121 = vmul.f32 %v1043, %v1120
        %vm1122 = vcmp.eq.f32.partialorder %v1043, inf
        %v1123 = vsel %vm1122, %v1043, %v1121
        %vm1124 = vcmp.eq.f32.partialorder %v1043, 0.0
        %v1125 = vand.u32 %v1043, 2147483648
        %v1126 = vsel %vm1124, %v1125, %v1123
        %v1127 = vrsqrt.pop %v1044
        %v1128 = vmul.f32 %v1044, %v1127
        %vm1129 = vcmp.eq.f32.partialorder %v1044, inf
        %v1130 = vsel %vm1129, %v1044, %v1128
        %vm1131 = vcmp.eq.f32.partialorder %v1044, 0.0
        %v1132 = vand.u32 %v1044, 2147483648
        %v1133 = vsel %vm1131, %v1132, %v1130
        %v1134 = vrsqrt.pop %v1045
        %v1135 = vmul.f32 %v1045, %v1134
        %vm1136 = vcmp.eq.f32.partialorder %v1045, inf
        %v1137 = vsel %vm1136, %v1045, %v1135
        %vm1138 = vcmp.eq.f32.partialorder %v1045, 0.0
        %v1139 = vand.u32 %v1045, 2147483648
        %v1140 = vsel %vm1138, %v1139, %v1137
        %v1141 = vrsqrt.pop %v1046
        %v1142 = vmul.f32 %v1046, %v1141
        %vm1143 = vcmp.eq.f32.partialorder %v1046, inf
        %v1144 = vsel %vm1143, %v1046, %v1142
        %vm1145 = vcmp.eq.f32.partialorder %v1046, 0.0
        %v1146 = vand.u32 %v1046, 2147483648
        %v1147 = vsel %vm1145, %v1146, %v1144
        %v1148 = vrsqrt.pop %v1047
        %v1149 = vmul.f32 %v1047, %v1148
        %vm1150 = vcmp.eq.f32.partialorder %v1047, inf
        %v1151 = vsel %vm1150, %v1047, %v1149
        %vm1152 = vcmp.eq.f32.partialorder %v1047, 0.0
        %v1153 = vand.u32 %v1047, 2147483648
        %v1154 = vsel %vm1152, %v1153, %v1151
        %v1155 = vrsqrt.pop %v1048
        %v1156 = vmul.f32 %v1048, %v1155
        %vm1157 = vcmp.eq.f32.partialorder %v1048, inf
        %v1158 = vsel %vm1157, %v1048, %v1156
        %vm1159 = vcmp.eq.f32.partialorder %v1048, 0.0
        %v1160 = vand.u32 %v1048, 2147483648
        %v1161 = vsel %vm1159, %v1160, %v1158
        %v1162 = vrsqrt.pop %v1049
        %v1163 = vmul.f32 %v1049, %v1162
        %vm1164 = vcmp.eq.f32.partialorder %v1049, inf
        %v1165 = vsel %vm1164, %v1049, %v1163
        %vm1166 = vcmp.eq.f32.partialorder %v1049, 0.0
        %v1167 = vand.u32 %v1049, 2147483648
        %v1168 = vsel %vm1166, %v1167, %v1165
        %v1169 = vadd.f32 %v1056, 1e-05
        %v1170 = vadd.f32 %v1063, 1e-05
        %v1171 = vadd.f32 %v1070, 1e-05
        %v1172 = vadd.f32 %v1077, 1e-05
        %v1173 = vadd.f32 %v1084, 1e-05
        %v1174 = vadd.f32 %v1091, 1e-05
        %v1175 = vadd.f32 %v1098, 1e-05
        %v1176 = vadd.f32 %v1105, 1e-05
        %v1177 = vadd.f32 %v1112, 1e-05
        %v1178 = vadd.f32 %v1119, 1e-05
        %v1179 = vadd.f32 %v1126, 1e-05
        %v1180 = vadd.f32 %v1133, 1e-05
        %v1181 = vadd.f32 %v1140, 1e-05
        %v1182 = vadd.f32 %v1147, 1e-05
        %v1183 = vadd.f32 %v1154, 1e-05
        %v1184 = vadd.f32 %v1161, 1e-05
        %v1185 = vadd.f32 %v1168, 1e-05
        %v1186 = vrcp.pop %v1169
        %v1187 = vrcp.pop %v1170
        %v1188 = vrcp.pop %v1171
        %v1189 = vrcp.pop %v1172
        %v1190 = vrcp.pop %v1173
        %v1191 = vrcp.pop %v1174
        %v1192 = vrcp.pop %v1175
        %v1193 = vrcp.pop %v1176
        %v1194 = vrcp.pop %v1177
        %v1195 = vrcp.pop %v1178
        %v1196 = vrcp.pop %v1179
        %v1197 = vrcp.pop %v1180
        %v1198 = vrcp.pop %v1181
        %v1199 = vrcp.pop %v1182
        %v1200 = vrcp.pop %v1183
        %v1201 = vrcp.pop %v1184
        %v1202 = vrcp.pop %v1185
        %v1203 = vmul.f32 %v942, %v1186
        %v1204 = vmul.f32 %v943, %v1187
        %v1205 = vmul.f32 %v944, %v1188
        %v1206 = vmul.f32 %v945, %v1189
        %v1207 = vmul.f32 %v946, %v1190
        %v1208 = vmul.f32 %v947, %v1191
        %v1209 = vmul.f32 %v948, %v1192
        %v1210 = vmul.f32 %v949, %v1193
        %v1211 = vmul.f32 %v950, %v1194
        %v1212 = vmul.f32 %v951, %v1195
        %v1213 = vmul.f32 %v952, %v1196
        %v1214 = vmul.f32 %v953, %v1197
        %v1215 = vmul.f32 %v954, %v1198
        %v1216 = vmul.f32 %v955, %v1199
        %v1217 = vmul.f32 %v956, %v1200
        %v1218 = vmul.f32 %v957, %v1201
        %v1219 = vmul.f32 %v958, %v1202
        %v1220 = vsel %vm872, %v1203, 0.0
        %v1221 = vsel %vm872, %v1204, 0.0
        %v1222 = vsel %vm872, %v1205, 0.0
        %v1223 = vsel %vm872, %v1206, 0.0
        %v1224 = vsel %vm872, %v1207, 0.0
        %v1225 = vsel %vm872, %v1208, 0.0
        %v1226 = vsel %vm872, %v1209, 0.0
        %v1227 = vsel %vm872, %v1210, 0.0
        %v1228 = vsel %vm872, %v1211, 0.0
        %v1229 = vsel %vm872, %v1212, 0.0
        %v1230 = vsel %vm872, %v1213, 0.0
        %v1231 = vsel %vm872, %v1214, 0.0
        %v1232 = vsel %vm872, %v1215, 0.0
        %v1233 = vsel %vm872, %v1216, 0.0
        %v1234 = vsel %vm872, %v1217, 0.0
        %v1235 = vsel %vm872, %v1218, 0.0
        %v1236 = vsel %vm872, %v1219, 0.0
        %1237 = vst [vmem:[%s181] sm:$0xff] %v1220
        %1238 = vst [vmem:[%s181 + $0x8] sm:$0xff] %v1221
        %1239 = vst [vmem:[%s181 + $0x10] sm:$0xff] %v1222
        %1240 = vst [vmem:[%s181 + $0x18] sm:$0xff] %v1223
        %1241 = vst [vmem:[%s181 + $0x20] sm:$0xff] %v1224
        %1242 = vst [vmem:[%s181 + $0x28] sm:$0xff] %v1225
        %1243 = vst [vmem:[%s181 + $0x30] sm:$0xff] %v1226
        %1244 = vst [vmem:[%s181 + $0x38] sm:$0xff] %v1227
        %1245 = vst [vmem:[%s181 + $0x40] sm:$0xff] %v1228
        %1246 = vst [vmem:[%s181 + $0x48] sm:$0xff] %v1229
        %1247 = vst [vmem:[%s181 + $0x50] sm:$0xff] %v1230
        %1248 = vst [vmem:[%s181 + $0x58] sm:$0xff] %v1231
        %1249 = vst [vmem:[%s181 + $0x60] sm:$0xff] %v1232
        %1250 = vst [vmem:[%s181 + $0x68] sm:$0xff] %v1233
        %1251 = vst [vmem:[%s181 + $0x70] sm:$0xff] %v1234
        %1252 = vst [vmem:[%s181 + $0x78] sm:$0xff] %v1235
        %1253 = vst [vmem:[%s181 + $0x80] sm:$0xff] %v1236
        %s1254 = sand.u32 %s80, 1
        %s1255 = scalar_lea.sflag [#allocation6], %s1254
        %s1256 = sand.u32 %s80, 1
        %s1257 = smul.addr %s1256, 136
        %s1258 = scalar_lea.vmem [#allocation9], %s1257
        // Predicated region
        $region37: #{tpu_custom_call.1} parent=27 // pred_check
          %p1259 = pneg %p90
        $region38: #{tpu_custom_call.1} parent=27 // pred_check_branch
          %1261 = sbr.rel (%p1259) target = $region40
        $region39: #{tpu_custom_call.1} parent=27 // pred_region
          %s1263 = ssub.s32 2176, 2176
          %1264 = vsyncadd %s1255, %s1263
          %s1265 = smul.addr %s25, 17
          %s1266 = smul.addr %s1265, 128
          %s1267 = scalar_lea.hbm %s3, %s1266
          %s1268 = sshll.u32 %s1258, 4
          %s1269 = int_to_ptr.vmem [resolvable:$true] %s1268
          %1274 = dma.vmem_to_hbm [thread:$0]  %s1269, 2176, %s1267, %s1255, 128, 128, 8
        $region40: #{tpu_custom_call.1} parent=27 // pred_fallthru
          _
      $region28: #{tpu_custom_call.1} parent=5 // pred_fallthru
        _
      %p1275 = scmp.le.s32.totalorder 2, %s20
      // Predicated region
      $region41: #{tpu_custom_call.1} parent=5 // pred_check
        %p1276 = pneg %p1275
      $region42: #{tpu_custom_call.1} parent=5 // pred_check_branch
        %1278 = sbr.rel (%p1276) target = $region44
      $region43: #{tpu_custom_call.1} parent=5 // pred_region
        %s1279 = ssub.s32 %s20, 2
        // Predicated region
        $region45: #{tpu_custom_call.1} parent=43 // pred_check
          %p1280 = pneg %p96
        $region46: #{tpu_custom_call.1} parent=43 // pred_check_branch
          %1282 = sbr.rel (%p1280) target = $region48
        $region47: #{tpu_custom_call.1} parent=43 // pred_region
          %s1283 = sand.u32 %s81, 1
          %s1284 = scalar_lea.sflag [#allocation6], %s1283
          %s1285 = sand.u32 %s81, 1
          %s1286 = smul.addr %s1285, 136
          %s1287 = scalar_lea.vmem [#allocation9], %s1286
          %1288 = dma.done %s1284, 2176
        $region48: #{tpu_custom_call.1} parent=43 // pred_fallthru
          _
      $region44: #{tpu_custom_call.1} parent=5 // pred_fallthru
        _
    $region6: #{tpu_custom_call.1} parent=1 // loop_footer
      %s24 = sadd.s32 1, %s20
    $region7: #{tpu_custom_call.1} parent=1 // loop_footer_branch
      %19 = sbr.rel target = $region3
    $region8: #{tpu_custom_call.1} parent=1 // loop_exit
      _
    %1289 = vsyncpa [#allocation5], 1
    %s1290 = scalar_lea.sflag [#allocation5], 1
    %1291 = vsyncpa %s1290, 1
    %1292 = vsyncpa [#allocation8], 1
    %1293 = vsyncpa [#allocation6], 1
    %s1294 = scalar_lea.sflag [#allocation6], 1
    %1295 = vsyncpa %s1294, 1

</llo_original>
